<compile_context>
chip_gen: v5e
topology: v5e:2x2
jax: 0.10.0
libtpu: 0.0.40
codegen_flags: <defaults>
</compile_context>

<pallas_src>
import functools

import jax
import jax.numpy as jnp
from jax.experimental import pallas as pl
from jax.experimental.pallas import tpu as pltpu


def _ssm_kernel(xh_ref, w_ref, b_ref, t_ref, pf_ref, out_ref, *,
                input_dim, hidden_dim):
    H = hidden_dim
    HH = H * H

    xh = xh_ref[...]                                  # (Din+H, TB)  = [x | h_prev]^T

    # One fused block-diagonal projection: rows = [A(x) ; B(x) ; C(h_prev)].
    proj = jnp.dot(w_ref[...], xh,
                   preferred_element_type=jnp.float32) + b_ref[...]   # (HH+H+O, TB)

    # Sublane slices at multiples of 8 rows (cheap, aligned).
    a_out = proj[:HH, :]                              # (H*H, TB)
    b_dyn = proj[HH:HH + H, :]                        # (H,   TB)
    c_dyn = proj[HH + H:, :]                          # (O,   TB)

    h = xh[input_dim:, :]                             # (H, TB) = h_prev^T

    # bmm(A_dyn, h_prev) with batch in lanes:
    #   h_rep[i*H+j, b] = h[j, b]                      (resident T on the MXU)
    #   h_next[i, b]    = sum_j a_out[i*H+j, b]*h_rep  (fold via resident Pf)
    h_rep = jnp.dot(t_ref[...], h, preferred_element_type=jnp.float32)        # (H*H, TB)
    h_bmm = jnp.dot(pf_ref[...], a_out * h_rep,
                    preferred_element_type=jnp.float32)                        # (H, TB)

    # Single merged output block; both stores are full-lane-width and
    # sublane-aligned (H and O are multiples of 8 here).
    out_ref[:H, :] = (h_bmm + b_dyn).astype(out_ref.dtype)
    out_ref[H:, :] = c_dyn.astype(out_ref.dtype)


def selective_state_space(x, h_prev, params, *, block_batch=None):
    """x: (B, Din) f32, h_prev: (B, H) f32. Returns (h_next (B,H), y (B,O))."""
    wa, ba, wb, bb, wc, bc = (params["wa"], params["ba"], params["wb"],
                              params["bb"], params["wc"], params["bc"])
    B, din = x.shape
    H = h_prev.shape[1]
    O = wc.shape[0]
    HH = H * H

    # Batch lives on the lane axis: take the whole batch when it fits, else
    # a large lane-aligned tile (multiple of 128).
    if block_batch is None:
        block_batch = B if B <= 1024 else 1024
    tb = block_batch
    assert tb == B or tb % 128 == 0, \
        "batch tile must be a multiple of 128 (or the full batch)"
    grid = (pl.cdiv(B, tb),)

    # Fused block-diagonal weight (HH+H+O, Din+H) and bias column (HH+H+O, 1).
    w_full = jnp.concatenate([
        jnp.concatenate([wa, jnp.zeros((HH, H), jnp.float32)], axis=1),
        jnp.concatenate([wb, jnp.zeros((H, H), jnp.float32)], axis=1),
        jnp.concatenate([jnp.zeros((O, din), jnp.float32), wc], axis=1),
    ], axis=0)
    b_full = jnp.concatenate([ba, bb, bc]).reshape(-1, 1)

    # Tiny resident matrices for the batched mat-vec:
    #   T[i*H+j, j] = 1 (replicate h), Pf[i, i*H+j] = 1 (fold groups of H rows).
    rows = jnp.arange(HH)
    t_mat = (rows[:, None] % H == jnp.arange(H)[None, :]).astype(jnp.float32)       # (HH, H)
    pf_mat = (jnp.arange(H)[:, None] == (rows[None, :] // H)).astype(jnp.float32)   # (H, HH)

    # Host-side layout plumbing: lane-dense transposed activations.
    xh_t = jnp.concatenate([x, h_prev], axis=1).T    # (Din+H, B)

    lane_spec = lambda nrows: pl.BlockSpec((nrows, tb), lambda i: (0, i))
    resident = lambda shape: pl.BlockSpec(shape, lambda i: (0,) * len(shape))

    # VMEM budget: 2x double-buffered activation/output tiles + (default
    # double-buffered) residents, x2 headroom, capped for v7x's 64 MiB.
    f32 = 4
    resident_bytes = (w_full.size + b_full.size + t_mat.size + pf_mat.size) * f32
    block_bytes = ((din + H) + (H + O)) * tb * f32
    needed = 2 * resident_bytes + 2 * block_bytes
    vmem_limit = int(min(48 * 1024 * 1024, max(32 * 1024 * 1024, 2 * needed)))

    kernel = functools.partial(_ssm_kernel, input_dim=din, hidden_dim=H)

    out = pl.pallas_call(
        kernel,
        grid=grid,
        in_specs=[
            lane_spec(din + H),              # [x | h_prev]^T   (pipelined)
            resident((HH + H + O, din + H)), # fused block-diag weight
            resident((HH + H + O, 1)),       # fused bias column
            resident((HH, H)),               # T
            resident((H, HH)),               # Pf
        ],
        out_specs=lane_spec(H + O),          # merged [h_next ; y]^T
        out_shape=jax.ShapeDtypeStruct((H + O, B), jnp.float32),
        compiler_params=pltpu.CompilerParams(
            dimension_semantics=("parallel",),
            vmem_limit_bytes=vmem_limit,
        ),
    )(xh_t, w_full, b_full, t_mat, pf_mat)

    h_next = out[:H, :].T
    y = out[H:, :].T
    return h_next, y


def init_params(key, input_dim, hidden_dim, output_dim):
    """Deterministic init matching the module's parameter shapes."""
    ks = jax.random.split(key, 6)

    def kaiming(k, out_f, in_f):
        bound = 1.0 / jnp.sqrt(in_f)
        return jax.random.uniform(k, (out_f, in_f), jnp.float32, -bound, bound)

    def bias(k, out_f, in_f):
        bound = 1.0 / jnp.sqrt(in_f)
        return jax.random.uniform(k, (out_f,), jnp.float32, -bound, bound)

    return {
        "wa": kaiming(ks[0], hidden_dim * hidden_dim, input_dim),
        "ba": bias(ks[1], hidden_dim * hidden_dim, input_dim),
        "wb": kaiming(ks[2], hidden_dim, input_dim),
        "bb": bias(ks[3], hidden_dim, input_dim),
        "wc": kaiming(ks[4], output_dim, hidden_dim),
        "bc": bias(ks[5], output_dim, hidden_dim),
    }


def _reference(x, h_prev, params):
    a_out = x @ params["wa"].T + params["ba"]           # (B, H*H)
    b_dyn = x @ params["wb"].T + params["bb"]           # (B, H)
    c_dyn = h_prev @ params["wc"].T + params["bc"]      # (B, O)
    H = h_prev.shape[1]
    a_dyn = a_out.reshape(-1, H, H)
    h_next = jnp.einsum("bij,bj->bi", a_dyn, h_prev) + b_dyn
    return h_next, c_dyn


if __name__ == "__main__":
    input_dim, hidden_dim, output_dim = 32, 8, 16
    key = jax.random.PRNGKey(0)
    k_p, k_x, k_h, k_x2, k_h2 = jax.random.split(key, 5)
    params = init_params(k_p, input_dim, hidden_dim, output_dim)

    # Case 1: small batch -> whole batch in one grid step (lane-dense output).
    batch = 16
    x = jax.random.normal(k_x, (batch, input_dim), jnp.float32)
    h_prev = jax.random.normal(k_h, (batch, hidden_dim), jnp.float32)
    h_next, y = selective_state_space(x, h_prev, params)
    jax.block_until_ready((h_next, y))
    h_ref, y_ref = _reference(x, h_prev, params)
    assert jnp.allclose(h_next, h_ref, atol=1e-4, rtol=1e-4), "h_next mismatch (case 1)"
    assert jnp.allclose(y, y_ref, atol=1e-4, rtol=1e-4), "y mismatch (case 1)"

    # Case 2: non-divisible batch with 128-lane tiles -> exercises the padded
    # edge block (masked writes) and multi-step pipelining.
    batch2 = 200
    x2 = jax.random.normal(k_x2, (batch2, input_dim), jnp.float32)
    h_prev2 = jax.random.normal(k_h2, (batch2, hidden_dim), jnp.float32)
    h_next2, y2 = selective_state_space(x2, h_prev2, params, block_batch=128)
    jax.block_until_ready((h_next2, y2))
    h_ref2, y_ref2 = _reference(x2, h_prev2, params)
    assert jnp.allclose(h_next2, h_ref2, atol=1e-4, rtol=1e-4), "h_next mismatch (case 2)"
    assert jnp.allclose(y2, y_ref2, atol=1e-4, rtol=1e-4), "y mismatch (case 2)"

    print("KERNEL_OK")
</pallas_src>

<mosaic_0001>
module attributes {stable_mosaic.version = 11 : i64} {
  func.func @_ssm_kernel(%arg0: i32, %arg1: memref<40x16xf32, #tpu.memory_space<vmem>>, %arg2: memref<88x40xf32, #tpu.memory_space<vmem>>, %arg3: memref<88x1xf32, #tpu.memory_space<vmem>>, %arg4: memref<64x8xf32, #tpu.memory_space<vmem>>, %arg5: memref<8x64xf32, #tpu.memory_space<vmem>>, %arg6: memref<24x16xf32, #tpu.memory_space<vmem>>) attributes {dimension_semantics = [#tpu.dimension_semantics<parallel>], iteration_bounds = array<i64: 1>, scalar_prefetch = 0 : i64, scratch_operands = 0 : i64, tpu.core_type = #tpu.core_type<tc>, window_params = [{transform_indices = @transform_0, window_bounds = array<i64: 40, 16>}, {pipeline_mode = #tpu.pipeline_mode<synchronous>, transform_indices = @transform_1, window_bounds = array<i64: 88, 40>}, {pipeline_mode = #tpu.pipeline_mode<synchronous>, transform_indices = @transform_2, window_bounds = array<i64: 88, 1>}, {pipeline_mode = #tpu.pipeline_mode<synchronous>, transform_indices = @transform_3, window_bounds = array<i64: 64, 8>}, {pipeline_mode = #tpu.pipeline_mode<synchronous>, transform_indices = @transform_4, window_bounds = array<i64: 8, 64>}, {transform_indices = @transform_5, window_bounds = array<i64: 24, 16>}]} {
    %c0 = arith.constant 0 : index
    %c0_0 = arith.constant 0 : index
    %0 = vector.load %arg1[%c0, %c0_0] : memref<40x16xf32, #tpu.memory_space<vmem>>, vector<40x16xf32>
    %c0_1 = arith.constant 0 : index
    %c0_2 = arith.constant 0 : index
    %1 = vector.load %arg2[%c0_1, %c0_2] : memref<88x40xf32, #tpu.memory_space<vmem>>, vector<88x40xf32>
    %cst = arith.constant dense<0.000000e+00> : vector<88x16xf32>
    %2 = tpu.matmul %1, %0, %cst {dimension_numbers = #tpu.dot_dimension_numbers<[1], [0], [0], [1], [0, 0, 1, 1], [], []>} : vector<88x40xf32>, vector<40x16xf32>, vector<88x16xf32> -> vector<88x16xf32>
    %c0_3 = arith.constant 0 : index
    %c0_4 = arith.constant 0 : index
    %3 = vector.load %arg3[%c0_3, %c0_4] : memref<88x1xf32, #tpu.memory_space<vmem>>, vector<88x1xf32>
    %4 = vector.broadcast %3 : vector<88x1xf32> to vector<88x16xf32>
    %5 = arith.addf %2, %4 : vector<88x16xf32>
    %6 = vector.extract_strided_slice %5 {offsets = [0, 0], sizes = [64, 16], strides = [1, 1]} : vector<88x16xf32> to vector<64x16xf32>
    %7 = vector.extract_strided_slice %5 {offsets = [64, 0], sizes = [8, 16], strides = [1, 1]} : vector<88x16xf32> to vector<8x16xf32>
    %8 = vector.extract_strided_slice %5 {offsets = [72, 0], sizes = [16, 16], strides = [1, 1]} : vector<88x16xf32> to vector<16x16xf32>
    %9 = vector.extract_strided_slice %0 {offsets = [32, 0], sizes = [8, 16], strides = [1, 1]} : vector<40x16xf32> to vector<8x16xf32>
    %c0_5 = arith.constant 0 : index
    %c0_6 = arith.constant 0 : index
    %10 = vector.load %arg4[%c0_5, %c0_6] : memref<64x8xf32, #tpu.memory_space<vmem>>, vector<64x8xf32>
    %cst_7 = arith.constant dense<0.000000e+00> : vector<64x16xf32>
    %11 = tpu.matmul %10, %9, %cst_7 {dimension_numbers = #tpu.dot_dimension_numbers<[1], [0], [0], [1], [0, 0, 1, 1], [], []>} : vector<64x8xf32>, vector<8x16xf32>, vector<64x16xf32> -> vector<64x16xf32>
    %c0_8 = arith.constant 0 : index
    %c0_9 = arith.constant 0 : index
    %12 = vector.load %arg5[%c0_8, %c0_9] : memref<8x64xf32, #tpu.memory_space<vmem>>, vector<8x64xf32>
    %13 = arith.mulf %6, %11 : vector<64x16xf32>
    %cst_10 = arith.constant dense<0.000000e+00> : vector<8x16xf32>
    %14 = tpu.matmul %12, %13, %cst_10 {dimension_numbers = #tpu.dot_dimension_numbers<[1], [0], [0], [1], [0, 0, 1, 1], [], []>} : vector<8x64xf32>, vector<64x16xf32>, vector<8x16xf32> -> vector<8x16xf32>
    %15 = arith.addf %14, %7 : vector<8x16xf32>
    %c0_11 = arith.constant 0 : index
    %c0_12 = arith.constant 0 : index
    %16 = vector.load %arg6[%c0_11, %c0_12] : memref<24x16xf32, #tpu.memory_space<vmem>>, vector<8x16xf32>
    tpu.vector_store %arg6[%c0_11, %c0_12], %15 {strides = array<i32>} : memref<24x16xf32, #tpu.memory_space<vmem>>, vector<8x16xf32>,
    %c8 = arith.constant 8 : index
    %c0_13 = arith.constant 0 : index
    %17 = vector.load %arg6[%c8, %c0_13] : memref<24x16xf32, #tpu.memory_space<vmem>>, vector<16x16xf32>
    tpu.vector_store %arg6[%c8, %c0_13], %8 {strides = array<i32>} : memref<24x16xf32, #tpu.memory_space<vmem>>, vector<16x16xf32>,
    return
  }
  func.func @transform_0(%arg0: i32) -> (i32, i32) {
    %c0_i32 = arith.constant 0 : i32
    %c0_i32_0 = arith.constant 0 : i32
    return %c0_i32, %arg0 : i32, i32
  }
  func.func @transform_1(%arg0: i32) -> (i32, i32) {
    %c0_i32 = arith.constant 0 : i32
    %c0_i32_0 = arith.constant 0 : i32
    %c0_i32_1 = arith.constant 0 : i32
    return %c0_i32, %c0_i32_0 : i32, i32
  }
  func.func @transform_2(%arg0: i32) -> (i32, i32) {
    %c0_i32 = arith.constant 0 : i32
    %c0_i32_0 = arith.constant 0 : i32
    %c0_i32_1 = arith.constant 0 : i32
    return %c0_i32, %c0_i32_0 : i32, i32
  }
  func.func @transform_3(%arg0: i32) -> (i32, i32) {
    %c0_i32 = arith.constant 0 : i32
    %c0_i32_0 = arith.constant 0 : i32
    %c0_i32_1 = arith.constant 0 : i32
    return %c0_i32, %c0_i32_0 : i32, i32
  }
  func.func @transform_4(%arg0: i32) -> (i32, i32) {
    %c0_i32 = arith.constant 0 : i32
    %c0_i32_0 = arith.constant 0 : i32
    %c0_i32_1 = arith.constant 0 : i32
    return %c0_i32, %c0_i32_0 : i32, i32
  }
  func.func @transform_5(%arg0: i32) -> (i32, i32) {
    %c0_i32 = arith.constant 0 : i32
    %c0_i32_0 = arith.constant 0 : i32
    return %c0_i32, %arg0 : i32, i32
  }
}

</mosaic_0001>

<llo_original>
// kernel: tpu_custom_call.1
$region0: #{tpu_custom_call.1}
  #allocation0 [shape = 'u32[]', space=smem, size = 0x4, offset = 0x4, fixed_abs, tag = 'smem constant byte address 0x4 - core index']
  #allocation1 [shape = 'u32[72,128]{1,0:T(1,128)}', space=vmem, size = 0x9000, scoped, tag = 'internal scratch']
  %s0 = inlined_call_operand.vmem [shape: f32[40,16], index: 0, kind: input, shape index: {}]
  %s1 = inlined_call_operand.vmem [shape: f32[88,40], index: 1, kind: input, shape index: {}]
  %s2 = inlined_call_operand.vmem [shape: f32[88,1], index: 2, kind: input, shape index: {}]
  %s3 = inlined_call_operand.vmem [shape: f32[64,8], index: 3, kind: input, shape index: {}]
  %s4 = inlined_call_operand.vmem [shape: f32[8,64], index: 4, kind: input, shape index: {}]
  %s5 = inlined_call_operand.vmem [shape: f32[24,16], index: 5, kind: output, shape index: {}]
  %s6 = sld [smem:[#allocation0]]
  $region30: #{tpu_custom_call.1} parent=0
    _
  %s8 = ssub.s32 1, %s6
  %s9 = scalar_select 0, %s8, %s6
  // Predicated region
  $region2: #{tpu_custom_call.1} parent=0 // pred_check
    _
  $region3: #{tpu_custom_call.1} parent=0 // pred_check_branch
    %11 = sbr.rel (0) target = $region5
  $region4: #{tpu_custom_call.1} parent=0 // pred_region
    _
  $region5: #{tpu_custom_call.1} parent=0 // pred_fallthru
    _
  // Predicated region
  $region6: #{tpu_custom_call.1} parent=0 // pred_check
    _
  $region7: #{tpu_custom_call.1} parent=0 // pred_check_branch
    %13 = sbr.rel (0) target = $region9
  $region8: #{tpu_custom_call.1} parent=0 // pred_region
    _
  $region9: #{tpu_custom_call.1} parent=0 // pred_fallthru
    _
  // Predicated region
  $region10: #{tpu_custom_call.1} parent=0 // pred_check
    _
  $region11: #{tpu_custom_call.1} parent=0 // pred_check_branch
    %15 = sbr.rel (0) target = $region13
  $region12: #{tpu_custom_call.1} parent=0 // pred_region
    _
  $region13: #{tpu_custom_call.1} parent=0 // pred_fallthru
    _
  // Predicated region
  $region14: #{tpu_custom_call.1} parent=0 // pred_check
    _
  $region15: #{tpu_custom_call.1} parent=0 // pred_check_branch
    %17 = sbr.rel (0) target = $region17
  $region16: #{tpu_custom_call.1} parent=0 // pred_region
    _
  $region17: #{tpu_custom_call.1} parent=0 // pred_fallthru
    _
  // Predicated region
  $region18: #{tpu_custom_call.1} parent=0 // pred_check
    _
  $region19: #{tpu_custom_call.1} parent=0 // pred_check_branch
    %19 = sbr.rel (0) target = $region21
  $region20: #{tpu_custom_call.1} parent=0 // pred_region
    _
  $region21: #{tpu_custom_call.1} parent=0 // pred_fallthru
    _
  %v20 = vld [vmem:[%s0] sm:$0xff]
  %v21 = vld [vmem:[%s0 + $0x8] sm:$0xff]
  %v22 = vld [vmem:[%s0 + $0x10] sm:$0xff]
  %v23 = vld [vmem:[%s0 + $0x18] sm:$0xff]
  %v24 = vld [vmem:[%s0 + $0x20] sm:$0xff]
  %v25 = vld [vmem:[%s1] sm:$0xff]
  %v26 = vld [vmem:[%s1 + $0x8] sm:$0xff]
  %v27 = vld [vmem:[%s1 + $0x10] sm:$0xff]
  %v28 = vld [vmem:[%s1 + $0x18] sm:$0xff]
  %v29 = vld [vmem:[%s1 + $0x20] sm:$0xff]
  %v30 = vld [vmem:[%s1 + $0x28] sm:$0xff]
  %v31 = vld [vmem:[%s1 + $0x30] sm:$0xff]
  %v32 = vld [vmem:[%s1 + $0x38] sm:$0xff]
  %v33 = vld [vmem:[%s1 + $0x40] sm:$0xff]
  %v34 = vld [vmem:[%s1 + $0x48] sm:$0xff]
  %v35 = vld [vmem:[%s1 + $0x50] sm:$0xff]
  %v36 = vld [vmem:[%s2] sm:$0xff]
  %v37 = vld [vmem:[%s2 + $0x8] sm:$0xff]
  %v38 = vld [vmem:[%s2 + $0x10] sm:$0xff]
  %v39 = vld [vmem:[%s2 + $0x18] sm:$0xff]
  %v40 = vld [vmem:[%s2 + $0x20] sm:$0xff]
  %v41 = vld [vmem:[%s2 + $0x28] sm:$0xff]
  %v42 = vld [vmem:[%s2 + $0x30] sm:$0xff]
  %v43 = vld [vmem:[%s2 + $0x38] sm:$0xff]
  %v44 = vld [vmem:[%s2 + $0x40] sm:$0xff]
  %v45 = vld [vmem:[%s2 + $0x48] sm:$0xff]
  %v46 = vld [vmem:[%s2 + $0x50] sm:$0xff]
  %48 = vset.pattern.permute.xlu0 0
  %49 = vperm.xlu0 %48, %v36
  %v50 = vpop.permute.xlu0 %49
  %53 = vset.pattern.permute.xlu0 0
  %54 = vperm.xlu0 %53, %v37
  %v55 = vpop.permute.xlu0 %54
  %58 = vset.pattern.permute.xlu0 0
  %59 = vperm.xlu0 %58, %v38
  %v60 = vpop.permute.xlu0 %59
  %63 = vset.pattern.permute.xlu0 0
  %64 = vperm.xlu0 %63, %v39
  %v65 = vpop.permute.xlu0 %64
  %68 = vset.pattern.permute.xlu0 0
  %69 = vperm.xlu0 %68, %v40
  %v70 = vpop.permute.xlu0 %69
  %73 = vset.pattern.permute.xlu0 0
  %74 = vperm.xlu0 %73, %v41
  %v75 = vpop.permute.xlu0 %74
  %78 = vset.pattern.permute.xlu0 0
  %79 = vperm.xlu0 %78, %v42
  %v80 = vpop.permute.xlu0 %79
  %83 = vset.pattern.permute.xlu0 0
  %84 = vperm.xlu0 %83, %v43
  %v85 = vpop.permute.xlu0 %84
  %88 = vset.pattern.permute.xlu0 0
  %89 = vperm.xlu0 %88, %v44
  %v90 = vpop.permute.xlu0 %89
  %93 = vset.pattern.permute.xlu0 0
  %94 = vperm.xlu0 %93, %v45
  %v95 = vpop.permute.xlu0 %94
  %98 = vset.pattern.permute.xlu0 0
  %99 = vperm.xlu0 %98, %v46
  %v100 = vpop.permute.xlu0 %99
  %vm102 = vcmask 326656
  %v104 = vsel %vm102, %v25, 0
  %v107 = vsel %vm102, %v26, 0
  %v110 = vsel %vm102, %v27, 0
  %v113 = vsel %vm102, %v28, 0
  %v116 = vsel %vm102, %v29, 0
  %v119 = vsel %vm102, %v30, 0
  %v122 = vsel %vm102, %v31, 0
  %v125 = vsel %vm102, %v32, 0
  %v128 = vsel %vm102, %v33, 0
  %v131 = vsel %vm102, %v34, 0
  %v134 = vsel %vm102, %v35, 0
  %136 = vmatpush.msra.mxu0 0.0
  %137 = vmatpush.msra.mxu0 0.0
  %138 = vmatpush.msra.mxu0 0.0
  %139 = vmatpush.msra.mxu0 0.0
  %140 = vmatpush.msra.mxu0 0.0
  %141 = vmatpush.msra.mxu0 0.0
  %142 = vmatpush.msra.mxu0 0.0
  %143 = vmatpush.msra.mxu0 0.0
  %144 = vmatpush.msra.mxu0 0.0
  %145 = vmatpush.msra.mxu0 0.0
  %146 = vmatpush.msra.mxu0 0.0
  %147 = vmatpush.msra.mxu0 %v24
  %148 = vmatpush.msra.mxu0 %v23
  %149 = vmatpush.msra.mxu0 %v22
  %150 = vmatpush.msra.mxu0 %v21
  %151 = vmatpush.msra.mxu0 %v20
  %152 = vmatmul.f32.gmra.mxu0 %v104
  %v153 = vpop.f32.mrf.mxu0
  %v154 = vadd.f32 %v50, %v153
  %155 = vmatmul.f32.gmra.mxu0 %v107
  %v156 = vpop.f32.mrf.mxu0
  %v157 = vadd.f32 %v55, %v156
  %158 = vmatmul.f32.gmra.mxu0 %v110
  %v159 = vpop.f32.mrf.mxu0
  %v160 = vadd.f32 %v60, %v159
  %161 = vmatmul.f32.gmra.mxu0 %v113
  %v162 = vpop.f32.mrf.mxu0
  %v163 = vadd.f32 %v65, %v162
  %164 = vmatmul.f32.gmra.mxu0 %v116
  %v165 = vpop.f32.mrf.mxu0
  %v166 = vadd.f32 %v70, %v165
  %167 = vmatmul.f32.gmra.mxu0 %v119
  %v168 = vpop.f32.mrf.mxu0
  %v169 = vadd.f32 %v75, %v168
  %170 = vmatmul.f32.gmra.mxu0 %v122
  %v171 = vpop.f32.mrf.mxu0
  %v172 = vadd.f32 %v80, %v171
  %173 = vmatmul.f32.gmra.mxu0 %v125
  %v174 = vpop.f32.mrf.mxu0
  %v175 = vadd.f32 %v85, %v174
  %176 = vmatmul.f32.gmra.mxu0 %v128
  %v177 = vpop.f32.mrf.mxu0
  %v178 = vadd.f32 %v90, %v177
  %179 = vmatmul.f32.gmra.mxu0 %v131
  %v180 = vpop.f32.mrf.mxu0
  %v181 = vadd.f32 %v95, %v180
  %182 = vmatmul.f32.gmra.mxu0 %v134
  %v183 = vpop.f32.mrf.mxu0
  %v184 = vadd.f32 %v100, %v183
  %185 = vdwg.mxu0
  %v186 = vld [vmem:[%s3] sm:$0xff]
  %v187 = vld [vmem:[%s3 + $0x8] sm:$0xff]
  %v188 = vld [vmem:[%s3 + $0x10] sm:$0xff]
  %v189 = vld [vmem:[%s3 + $0x18] sm:$0xff]
  %v190 = vld [vmem:[%s3 + $0x20] sm:$0xff]
  %v191 = vld [vmem:[%s3 + $0x28] sm:$0xff]
  %v192 = vld [vmem:[%s3 + $0x30] sm:$0xff]
  %v193 = vld [vmem:[%s3 + $0x38] sm:$0xff]
  %vm194 = vcmask 64512
  %v196 = vsel %vm194, %v186, 0
  %v199 = vsel %vm194, %v187, 0
  %v202 = vsel %vm194, %v188, 0
  %v205 = vsel %vm194, %v189, 0
  %v208 = vsel %vm194, %v190, 0
  %v211 = vsel %vm194, %v191, 0
  %v214 = vsel %vm194, %v192, 0
  %v217 = vsel %vm194, %v193, 0
  %219 = vmatpush.msra.mxu0 0.0
  %220 = vmatpush.msra.mxu0 0.0
  %221 = vmatpush.msra.mxu0 0.0
  %222 = vmatpush.msra.mxu0 0.0
  %223 = vmatpush.msra.mxu0 0.0
  %224 = vmatpush.msra.mxu0 0.0
  %225 = vmatpush.msra.mxu0 0.0
  %226 = vmatpush.msra.mxu0 0.0
  %227 = vmatpush.msra.mxu0 0.0
  %228 = vmatpush.msra.mxu0 0.0
  %229 = vmatpush.msra.mxu0 0.0
  %230 = vmatpush.msra.mxu0 0.0
  %231 = vmatpush.msra.mxu0 0.0
  %232 = vmatpush.msra.mxu0 0.0
  %233 = vmatpush.msra.mxu0 0.0
  %234 = vmatpush.msra.mxu0 %v24
  %235 = vmatmul.f32.gmra.mxu0 %v196
  %v236 = vpop.f32.mrf.mxu0
  %v237 = vadd.f32 0.0, %v236
  %238 = vmatmul.f32.gmra.mxu0 %v199
  %v239 = vpop.f32.mrf.mxu0
  %v240 = vadd.f32 0.0, %v239
  %241 = vmatmul.f32.gmra.mxu0 %v202
  %v242 = vpop.f32.mrf.mxu0
  %v243 = vadd.f32 0.0, %v242
  %244 = vmatmul.f32.gmra.mxu0 %v205
  %v245 = vpop.f32.mrf.mxu0
  %v246 = vadd.f32 0.0, %v245
  %247 = vmatmul.f32.gmra.mxu0 %v208
  %v248 = vpop.f32.mrf.mxu0
  %v249 = vadd.f32 0.0, %v248
  %250 = vmatmul.f32.gmra.mxu0 %v211
  %v251 = vpop.f32.mrf.mxu0
  %v252 = vadd.f32 0.0, %v251
  %253 = vmatmul.f32.gmra.mxu0 %v214
  %v254 = vpop.f32.mrf.mxu0
  %v255 = vadd.f32 0.0, %v254
  %256 = vmatmul.f32.gmra.mxu0 %v217
  %v257 = vpop.f32.mrf.mxu0
  %v258 = vadd.f32 0.0, %v257
  %259 = vdwg.mxu0
  %v260 = vld [vmem:[%s4] sm:$0xff]
  %v261 = vmul.f32 %v154, %v237
  %v262 = vmul.f32 %v157, %v240
  %v263 = vmul.f32 %v160, %v243
  %v264 = vmul.f32 %v163, %v246
  %v265 = vmul.f32 %v166, %v249
  %v266 = vmul.f32 %v169, %v252
  %v267 = vmul.f32 %v172, %v255
  %v268 = vmul.f32 %v175, %v258
  %vm269 = vcmask 523264
  %v271 = vsel %vm269, %v260, 0
  %273 = vmatpush.msra.mxu0 0.0
  %274 = vmatpush.msra.mxu0 0.0
  %275 = vmatpush.msra.mxu0 0.0
  %276 = vmatpush.msra.mxu0 0.0
  %277 = vmatpush.msra.mxu0 0.0
  %278 = vmatpush.msra.mxu0 0.0
  %279 = vmatpush.msra.mxu0 0.0
  %280 = vmatpush.msra.mxu0 0.0
  %281 = vmatpush.msra.mxu0 %v268
  %282 = vmatpush.msra.mxu0 %v267
  %283 = vmatpush.msra.mxu0 %v266
  %284 = vmatpush.msra.mxu0 %v265
  %285 = vmatpush.msra.mxu0 %v264
  %286 = vmatpush.msra.mxu0 %v263
  %287 = vmatpush.msra.mxu0 %v262
  %288 = vmatpush.msra.mxu0 %v261
  %289 = vmatmul.f32.gmra.mxu0 %v271
  %v290 = vpop.f32.mrf.mxu0
  %v291 = vadd.f32 %v178, %v290
  %292 = vdwg.mxu0
  %vm293 = vcmask 130048
  %294 = vst.msk [vmem:[%s5] sm:$0xff] %vm293, %v291
  %295 = vst.msk [vmem:[%s5 + $0x8] sm:$0xff] %vm293, %v181
  %296 = vst.msk [vmem:[%s5 + $0x10] sm:$0xff] %vm293, %v184
  // Predicated region
  $region22: #{tpu_custom_call.1} parent=0 // pred_check
    _
  $region23: #{tpu_custom_call.1} parent=0 // pred_check_branch
    %298 = sbr.rel (0) target = $region25
  $region24: #{tpu_custom_call.1} parent=0 // pred_region
    _
  $region25: #{tpu_custom_call.1} parent=0 // pred_fallthru
    _
  // Predicated region
  $region26: #{tpu_custom_call.1} parent=0 // pred_check
    _
  $region27: #{tpu_custom_call.1} parent=0 // pred_check_branch
    %300 = sbr.rel (0) target = $region29
  $region28: #{tpu_custom_call.1} parent=0 // pred_region
    _
  $region29: #{tpu_custom_call.1} parent=0 // pred_fallthru
    _

</llo_original>
